<compile_context>
chip_gen: v7x
topology: tpu7x:2x2x1
jax: 0.10.0
libtpu: 0.0.40
codegen_flags: <defaults>
</compile_context>

<pallas_src>
import jax
import jax.numpy as jnp
import numpy as np
from jax.experimental import pallas as pl
from jax.experimental.pallas import tpu as pltpu

# ----------------------------- configuration --------------------------------
G   = 2      # num_group (=> num_comb = 1)
B   = 8      # batch
XD  = 8      # num_xdim[m]
H1  = 16     # h_sizes[m][0]  (first h layer, maxout pool 2)
D   = 8      # h_sizes[m][-1] = num_hdim[m] = num_dim
HZ1 = 16     # hz_sizes[0]
GD  = G * D  # 16
EPS = 1e-5   # BatchNorm1d eps

# --- slab A layout (wide matrices, 64 lanes = 2*2*H1 = 2*2*HZ1) ---
A_W1, A_Z1, A_B1, A_ZB1 = 0, 16, 32, 40
A_ROWS, A_COLS = 48, 4 * H1            # 48 x 64  (row offsets 8-aligned)
# --- slab B layout (narrow matrices, 16 lanes = G*D) ---
B_W2, B_Z2, B_WB, B_ZWQ, B_ZWL = 0, 32, 64, 80, 88
B_ROWS, B_COLS = 96, GD                # 96 x 16


# ------------------------------- kernel --------------------------------------
def net_kernel(scal_ref,       # SMEM (4,): pw0, pw1, pb, b
               x_ref,          # VMEM [B, 2*XD]   (x0 | x1 on lanes)
               a_ref,          # VMEM [48, 64]    wide-parameter slab
               b_ref,          # VMEM [96, 16]    narrow-parameter slab
               logits_ref,     # out  [B, 1]
               hh_ref):        # out  [B, 2*GD]   (hbn | h_nonlin on lanes)
    pw0 = scal_ref[0]
    pw1 = scal_ref[1]
    pb = scal_ref[2]
    bias = scal_ref[3]

    x = x_ref[...]                                               # [B, 16]

    # ---- h path: fused Linear(+bias) -> maxout(2) -> Linear -> BatchNorm ----
    y = jnp.dot(x, a_ref[A_W1:A_W1 + 2 * XD, :],
                preferred_element_type=jnp.float32) + a_ref[A_B1:A_B1 + 1, :]
    # columns pre-permuted to (g0 even | g1 even | g0 odd | g1 odd) so the
    # adjacent-pair maxout of both groups is one vector max:
    y = jnp.maximum(y[:, :2 * H1], y[:, 2 * H1:])                # [B, 32]
    hm = jnp.dot(y, b_ref[B_W2:B_W2 + 2 * H1, :],
                 preferred_element_type=jnp.float32)             # [B, GD]
    mu = jnp.mean(hm, axis=0, keepdims=True)
    var = jnp.mean((hm - mu) ** 2, axis=0, keepdims=True)
    hb = (hm - mu) * jax.lax.rsqrt(var + EPS)                    # [B, GD]

    # gauss-maxout nonlinearity: max over the two pw entries of pw*(h - pb)
    dlt = hb - pb
    hn = jnp.maximum(pw0 * dlt, pw1 * dlt)                       # [B, GD]

    # bilinear logits for the single group pair (0,1), one matmul via wbig:
    #   wbig[:D, D:] = w0, wbig[D:, :D] = w1  =>
    #   sum((hn @ wbig) * hb) = sum_ij w0[i,j] hn0_i hb1_j + w1[i,j] hn1_i hb0_j
    t = jnp.dot(hn, b_ref[B_WB:B_WB + GD, :], preferred_element_type=jnp.float32)
    logit = jnp.sum(t * hb, axis=1, keepdims=True)               # [B, 1]

    # ---- hz path: fused Linear(+bias) -> maxout(2) -> Linear -> BatchNorm ----
    zy = jnp.dot(hb, a_ref[A_Z1:A_Z1 + GD, :],
                 preferred_element_type=jnp.float32) + a_ref[A_ZB1:A_ZB1 + 1, :]
    zy = jnp.maximum(zy[:, :2 * HZ1], zy[:, 2 * HZ1:])           # [B, 32]
    hz = jnp.dot(zy, b_ref[B_Z2:B_Z2 + 2 * HZ1, :],
                 preferred_element_type=jnp.float32)             # [B, GD]
    muz = jnp.mean(hz, axis=0, keepdims=True)
    varz = jnp.mean((hz - muz) ** 2, axis=0, keepdims=True)
    hzb = (hz - muz) * jax.lax.rsqrt(varz + EPS)

    logit = logit + jnp.sum(b_ref[B_ZWQ:B_ZWQ + 1, :] * hzb * hzb
                            + b_ref[B_ZWL:B_ZWL + 1, :] * hzb,
                            axis=1, keepdims=True)

    logits_ref[...] = logit + bias
    hh_ref[:, 0:GD] = hb
    hh_ref[:, GD:2 * GD] = hn


# ------------------------------ wrapper ---------------------------------------
def _build_slabs(p):
    """Pack all per-group weights/biases into two flat f32 slabs:
       slab A [48,64]: block-diag W1 (maxout-col-permuted), block-diag Z1, b1 row, zb1 row
       slab B [96,16]: block-diag W2, block-diag Z2, bilinear wbig, zw quad/lin rows."""
    W1, b1 = p['W1'], p['b1']          # [G, XD, 2H1], [G, 2H1]
    W2 = p['W2']                       # [G, H1, D]
    Z1w, zb1 = p['Z1'], p['zb1']       # [G, D, 2HZ1], [G, 2HZ1]
    Z2w = p['Z2']                      # [G, HZ1, D]
    w0, w1m, zw = p['w0'], p['w1m'], p['zw']

    A = jnp.zeros((A_ROWS, A_COLS), jnp.float32)
    # W1 block-diagonal, columns reordered (g0 even | g1 even | g0 odd | g1 odd)
    A = A.at[0:XD,           0:H1].set(W1[0][:, 0::2])
    A = A.at[0:XD,      2*H1:3*H1].set(W1[0][:, 1::2])
    A = A.at[XD:2*XD,     H1:2*H1].set(W1[1][:, 0::2])
    A = A.at[XD:2*XD,   3*H1:4*H1].set(W1[1][:, 1::2])
    # Z1 block-diagonal, same column order
    A = A.at[A_Z1:A_Z1+D,            0:HZ1].set(Z1w[0][:, 0::2])
    A = A.at[A_Z1:A_Z1+D,       2*HZ1:3*HZ1].set(Z1w[0][:, 1::2])
    A = A.at[A_Z1+D:A_Z1+2*D,     HZ1:2*HZ1].set(Z1w[1][:, 0::2])
    A = A.at[A_Z1+D:A_Z1+2*D,   3*HZ1:4*HZ1].set(Z1w[1][:, 1::2])
    # bias rows in the fused column order
    A = A.at[A_B1, :].set(jnp.concatenate(
        [b1[0][0::2], b1[1][0::2], b1[0][1::2], b1[1][1::2]]))
    A = A.at[A_ZB1, :].set(jnp.concatenate(
        [zb1[0][0::2], zb1[1][0::2], zb1[0][1::2], zb1[1][1::2]]))

    Bm = jnp.zeros((B_ROWS, B_COLS), jnp.float32)
    Bm = Bm.at[0:H1,          0:D].set(W2[0])
    Bm = Bm.at[H1:2*H1,     D:2*D].set(W2[1])
    Bm = Bm.at[B_Z2:B_Z2+HZ1,          0:D].set(Z2w[0])
    Bm = Bm.at[B_Z2+HZ1:B_Z2+2*HZ1,  D:2*D].set(Z2w[1])
    Bm = Bm.at[B_WB:B_WB+D,        D:2*D].set(w0)
    Bm = Bm.at[B_WB+D:B_WB+2*D,      0:D].set(w1m)
    Bm = Bm.at[B_ZWQ, :].set(jnp.concatenate([zw[0, :, 0], zw[1, :, 0]]))
    Bm = Bm.at[B_ZWL, :].set(jnp.concatenate([zw[0, :, 1], zw[1, :, 1]]))
    return A, Bm


def net_forward(x, params):
    """x: [G, B, XD] (stacked per-group inputs). Returns (logits[B], h_bn[B,G,D],
    h_nonlin[B,G,D,1]) matching the PyTorch Net.forward outputs."""
    scal = jnp.array([params['pw'][0, 0], params['pw'][0, 1],
                      params['pb'][0], params['b'][0]], dtype=jnp.float32)
    slab_a, slab_b = _build_slabs(params)
    xcat = jnp.concatenate([x[0], x[1]], axis=-1)        # [B, 2*XD]

    vmem = pl.BlockSpec(memory_space=pltpu.MemorySpace.VMEM)
    smem = pl.BlockSpec(memory_space=pltpu.MemorySpace.SMEM)

    flops = 2 * B * (2 * XD * 4 * H1 + 2 * H1 * GD + GD * GD
                     + GD * 4 * HZ1 + 2 * HZ1 * GD)
    bytes_acc = 4 * (4 + B * 2 * XD + A_ROWS * A_COLS + B_ROWS * B_COLS
                     + B + B * 2 * GD)

    logits2d, hh = pl.pallas_call(
        net_kernel,
        out_shape=(jax.ShapeDtypeStruct((B, 1), jnp.float32),
                   jax.ShapeDtypeStruct((B, 2 * GD), jnp.float32)),
        in_specs=[smem, vmem, vmem, vmem],
        out_specs=(vmem, vmem),
        cost_estimate=pl.CostEstimate(flops=flops, transcendentals=2 * GD,
                                      bytes_accessed=bytes_acc),
    )(scal, xcat, slab_a, slab_b)

    logits = logits2d[:, 0]                               # [B]
    h_bn = hh[:, :GD].reshape(B, G, D)                    # [B, G, D] (no transpose)
    h_nonlin = hh[:, GD:].reshape(B, G, D)[..., None]     # [B, G, D, 1]
    return logits, h_bn, h_nonlin


# ------------------------- pure-JAX reference ---------------------------------
def ref_forward(x, p):
    hbn = []
    for g in range(G):
        y = x[g] @ p['W1'][g] + p['b1'][g]
        y = jnp.max(y.reshape(B, H1, 2), axis=-1)          # torch adjacent-pair maxout
        hm = y @ p['W2'][g]
        mu = hm.mean(0)
        var = ((hm - mu) ** 2).mean(0)
        hbn.append((hm - mu) / jnp.sqrt(var + EPS))
    hbn = jnp.stack(hbn, axis=1)                           # [B, G, D]
    hn = jnp.max(p['pw'][None, None, None, :, :]
                 * (hbn[:, :, :, None, None] - p['pb'][None, None, None, :, None]),
                 axis=-1)                                  # [B, G, D, 1]
    logits = (jnp.einsum('bi,ij,bj->b', hn[:, 0, :, 0], p['w0'], hbn[:, 1])
              + jnp.einsum('bi,ij,bj->b', hn[:, 1, :, 0], p['w1m'], hbn[:, 0]))
    for g in range(G):
        zy = hbn[:, g] @ p['Z1'][g] + p['zb1'][g]
        zy = jnp.max(zy.reshape(B, HZ1, 2), axis=-1)
        hz = zy @ p['Z2'][g]
        mu = hz.mean(0)
        var = ((hz - mu) ** 2).mean(0)
        hzb = (hz - mu) / jnp.sqrt(var + EPS)
        logits = logits + jnp.sum(p['zw'][g, :, 0] * hzb ** 2
                                  + p['zw'][g, :, 1] * hzb, axis=1)
    return logits + p['b'][0], hbn, hn


# --------------------------------- main ---------------------------------------
if __name__ == "__main__":
    key = jax.random.PRNGKey(0)
    ks = jax.random.split(key, 13)
    params = {
        'W1':  0.3 * jax.random.normal(ks[0], (G, XD, 2 * H1), jnp.float32),
        'b1':  0.1 * jax.random.normal(ks[1], (G, 2 * H1), jnp.float32),
        'W2':  0.3 * jax.random.normal(ks[2], (G, H1, D), jnp.float32),
        'Z1':  0.3 * jax.random.normal(ks[3], (G, D, 2 * HZ1), jnp.float32),
        'zb1': 0.1 * jax.random.normal(ks[4], (G, 2 * HZ1), jnp.float32),
        'Z2':  0.3 * jax.random.normal(ks[5], (G, HZ1, D), jnp.float32),
        'w0':  0.1 * jax.random.normal(ks[6], (D, D), jnp.float32),
        'w1m': 0.1 * jax.random.normal(ks[7], (D, D), jnp.float32),
        'zw':  0.1 * jax.random.normal(ks[8], (G, D, 2), jnp.float32),
        'pw':        jax.random.normal(ks[9], (1, 2), jnp.float32),
        'pb':  0.1 * jax.random.normal(ks[10], (1,), jnp.float32),
        'b':   0.1 * jax.random.normal(ks[11], (1,), jnp.float32),
    }
    # input: G-length list of [B, XD] in the PyTorch module, stacked here to [G, B, XD]
    x = jax.random.normal(ks[12], (G, B, XD), jnp.float32)

    logits, h_bn, h_nonlin = net_forward(x, params)
    jax.block_until_ready((logits, h_bn, h_nonlin))

    rl, rh, rn = ref_forward(x, params)
    np.testing.assert_allclose(np.asarray(logits), np.asarray(rl), rtol=2e-2, atol=2e-2)
    np.testing.assert_allclose(np.asarray(h_bn), np.asarray(rh), rtol=2e-2, atol=2e-2)
    np.testing.assert_allclose(np.asarray(h_nonlin), np.asarray(rn), rtol=2e-2, atol=2e-2)
    print("KERNEL_OK")
</pallas_src>

<mosaic_0001>
module attributes {stable_mosaic.version = 11 : i64} {
  func.func @net_kernel(%arg0: memref<4xf32, #tpu.memory_space<smem>>, %arg1: memref<8x16xf32, #tpu.memory_space<vmem>>, %arg2: memref<48x64xf32, #tpu.memory_space<vmem>>, %arg3: memref<96x16xf32, #tpu.memory_space<vmem>>, %arg4: memref<8x1xf32, #tpu.memory_space<vmem>>, %arg5: memref<8x32xf32, #tpu.memory_space<vmem>>) attributes {dimension_semantics = [], scalar_prefetch = 0 : i64, scratch_operands = 0 : i64, tpu.core_type = #tpu.core_type<tc>} {
    %c0 = arith.constant 0 : index
    %0 = memref.load %arg0[%c0] : memref<4xf32, #tpu.memory_space<smem>>
    %c1 = arith.constant 1 : index
    %1 = memref.load %arg0[%c1] : memref<4xf32, #tpu.memory_space<smem>>
    %c2 = arith.constant 2 : index
    %2 = memref.load %arg0[%c2] : memref<4xf32, #tpu.memory_space<smem>>
    %c3 = arith.constant 3 : index
    %3 = memref.load %arg0[%c3] : memref<4xf32, #tpu.memory_space<smem>>
    %c0_0 = arith.constant 0 : index
    %c0_1 = arith.constant 0 : index
    %4 = vector.load %arg1[%c0_0, %c0_1] : memref<8x16xf32, #tpu.memory_space<vmem>>, vector<8x16xf32>
    %c0_2 = arith.constant 0 : index
    %c0_3 = arith.constant 0 : index
    %5 = vector.load %arg2[%c0_2, %c0_3] : memref<48x64xf32, #tpu.memory_space<vmem>>, vector<16x64xf32>
    %cst = arith.constant dense<0.000000e+00> : vector<8x64xf32>
    %6 = tpu.matmul %4, %5, %cst {dimension_numbers = #tpu.dot_dimension_numbers<[1], [0], [0], [1], [0, 0, 1, 1], [], []>} : vector<8x16xf32>, vector<16x64xf32>, vector<8x64xf32> -> vector<8x64xf32>
    %c32 = arith.constant 32 : index
    %c0_4 = arith.constant 0 : index
    %7 = vector.load %arg2[%c32, %c0_4] : memref<48x64xf32, #tpu.memory_space<vmem>>, vector<1x64xf32>
    %8 = vector.broadcast %7 : vector<1x64xf32> to vector<8x64xf32>
    %9 = arith.addf %6, %8 : vector<8x64xf32>
    %10 = vector.extract_strided_slice %9 {offsets = [0, 0], sizes = [8, 32], strides = [1, 1]} : vector<8x64xf32> to vector<8x32xf32>
    %11 = vector.extract_strided_slice %9 {offsets = [0, 32], sizes = [8, 32], strides = [1, 1]} : vector<8x64xf32> to vector<8x32xf32>
    %12 = arith.maximumf %10, %11 : vector<8x32xf32>
    %c0_5 = arith.constant 0 : index
    %c0_6 = arith.constant 0 : index
    %13 = vector.load %arg3[%c0_5, %c0_6] : memref<96x16xf32, #tpu.memory_space<vmem>>, vector<32x16xf32>
    %cst_7 = arith.constant dense<0.000000e+00> : vector<8x16xf32>
    %14 = tpu.matmul %12, %13, %cst_7 {dimension_numbers = #tpu.dot_dimension_numbers<[1], [0], [0], [1], [0, 0, 1, 1], [], []>} : vector<8x32xf32>, vector<32x16xf32>, vector<8x16xf32> -> vector<8x16xf32>
    %cst_8 = arith.constant dense<0.000000e+00> : vector<16xf32>
    %15 = vector.multi_reduction <add>, %14, %cst_8 [0] : vector<8x16xf32> to vector<16xf32>
    %16 = vector.shape_cast %15 : vector<16xf32> to vector<1x16xf32>
    %cst_9 = arith.constant 8.000000e+00 : f32
    %17 = vector.broadcast %cst_9 : f32 to vector<1x16xf32>
    %18 = arith.divf %16, %17 : vector<1x16xf32>
    %19 = vector.broadcast %18 : vector<1x16xf32> to vector<8x16xf32>
    %20 = arith.subf %14, %19 : vector<8x16xf32>
    %21 = arith.mulf %20, %20 : vector<8x16xf32>
    %cst_10 = arith.constant dense<0.000000e+00> : vector<16xf32>
    %22 = vector.multi_reduction <add>, %21, %cst_10 [0] : vector<8x16xf32> to vector<16xf32>
    %23 = vector.shape_cast %22 : vector<16xf32> to vector<1x16xf32>
    %cst_11 = arith.constant 8.000000e+00 : f32
    %24 = vector.broadcast %cst_11 : f32 to vector<1x16xf32>
    %25 = arith.divf %23, %24 : vector<1x16xf32>
    %26 = vector.broadcast %18 : vector<1x16xf32> to vector<8x16xf32>
    %27 = arith.subf %14, %26 : vector<8x16xf32>
    %cst_12 = arith.constant 9.99999974E-6 : f32
    %28 = vector.broadcast %cst_12 : f32 to vector<1x16xf32>
    %29 = arith.addf %25, %28 : vector<1x16xf32>
    %30 = math.rsqrt %29 : vector<1x16xf32>
    %31 = vector.broadcast %30 : vector<1x16xf32> to vector<8x16xf32>
    %32 = arith.mulf %27, %31 : vector<8x16xf32>
    %33 = vector.broadcast %2 : f32 to vector<8x16xf32>
    %34 = arith.subf %32, %33 : vector<8x16xf32>
    %35 = vector.broadcast %0 : f32 to vector<8x16xf32>
    %36 = arith.mulf %35, %34 : vector<8x16xf32>
    %37 = vector.broadcast %1 : f32 to vector<8x16xf32>
    %38 = arith.mulf %37, %34 : vector<8x16xf32>
    %39 = arith.maximumf %36, %38 : vector<8x16xf32>
    %c64 = arith.constant 64 : index
    %c0_13 = arith.constant 0 : index
    %40 = vector.load %arg3[%c64, %c0_13] : memref<96x16xf32, #tpu.memory_space<vmem>>, vector<16x16xf32>
    %cst_14 = arith.constant dense<0.000000e+00> : vector<8x16xf32>
    %41 = tpu.matmul %39, %40, %cst_14 {dimension_numbers = #tpu.dot_dimension_numbers<[1], [0], [0], [1], [0, 0, 1, 1], [], []>} : vector<8x16xf32>, vector<16x16xf32>, vector<8x16xf32> -> vector<8x16xf32>
    %42 = arith.mulf %41, %32 : vector<8x16xf32>
    %cst_15 = arith.constant dense<0.000000e+00> : vector<8xf32>
    %43 = vector.multi_reduction <add>, %42, %cst_15 [1] : vector<8x16xf32> to vector<8xf32>
    %44 = vector.shape_cast %43 : vector<8xf32> to vector<8x1xf32>
    %c16 = arith.constant 16 : index
    %c0_16 = arith.constant 0 : index
    %45 = vector.load %arg2[%c16, %c0_16] : memref<48x64xf32, #tpu.memory_space<vmem>>, vector<16x64xf32>
    %cst_17 = arith.constant dense<0.000000e+00> : vector<8x64xf32>
    %46 = tpu.matmul %32, %45, %cst_17 {dimension_numbers = #tpu.dot_dimension_numbers<[1], [0], [0], [1], [0, 0, 1, 1], [], []>} : vector<8x16xf32>, vector<16x64xf32>, vector<8x64xf32> -> vector<8x64xf32>
    %c40 = arith.constant 40 : index
    %c0_18 = arith.constant 0 : index
    %47 = vector.load %arg2[%c40, %c0_18] : memref<48x64xf32, #tpu.memory_space<vmem>>, vector<1x64xf32>
    %48 = vector.broadcast %47 : vector<1x64xf32> to vector<8x64xf32>
    %49 = arith.addf %46, %48 : vector<8x64xf32>
    %50 = vector.extract_strided_slice %49 {offsets = [0, 0], sizes = [8, 32], strides = [1, 1]} : vector<8x64xf32> to vector<8x32xf32>
    %51 = vector.extract_strided_slice %49 {offsets = [0, 32], sizes = [8, 32], strides = [1, 1]} : vector<8x64xf32> to vector<8x32xf32>
    %52 = arith.maximumf %50, %51 : vector<8x32xf32>
    %c32_19 = arith.constant 32 : index
    %c0_20 = arith.constant 0 : index
    %53 = vector.load %arg3[%c32_19, %c0_20] : memref<96x16xf32, #tpu.memory_space<vmem>>, vector<32x16xf32>
    %cst_21 = arith.constant dense<0.000000e+00> : vector<8x16xf32>
    %54 = tpu.matmul %52, %53, %cst_21 {dimension_numbers = #tpu.dot_dimension_numbers<[1], [0], [0], [1], [0, 0, 1, 1], [], []>} : vector<8x32xf32>, vector<32x16xf32>, vector<8x16xf32> -> vector<8x16xf32>
    %cst_22 = arith.constant dense<0.000000e+00> : vector<16xf32>
    %55 = vector.multi_reduction <add>, %54, %cst_22 [0] : vector<8x16xf32> to vector<16xf32>
    %56 = vector.shape_cast %55 : vector<16xf32> to vector<1x16xf32>
    %cst_23 = arith.constant 8.000000e+00 : f32
    %57 = vector.broadcast %cst_23 : f32 to vector<1x16xf32>
    %58 = arith.divf %56, %57 : vector<1x16xf32>
    %59 = vector.broadcast %58 : vector<1x16xf32> to vector<8x16xf32>
    %60 = arith.subf %54, %59 : vector<8x16xf32>
    %61 = arith.mulf %60, %60 : vector<8x16xf32>
    %cst_24 = arith.constant dense<0.000000e+00> : vector<16xf32>
    %62 = vector.multi_reduction <add>, %61, %cst_24 [0] : vector<8x16xf32> to vector<16xf32>
    %63 = vector.shape_cast %62 : vector<16xf32> to vector<1x16xf32>
    %cst_25 = arith.constant 8.000000e+00 : f32
    %64 = vector.broadcast %cst_25 : f32 to vector<1x16xf32>
    %65 = arith.divf %63, %64 : vector<1x16xf32>
    %66 = vector.broadcast %58 : vector<1x16xf32> to vector<8x16xf32>
    %67 = arith.subf %54, %66 : vector<8x16xf32>
    %cst_26 = arith.constant 9.99999974E-6 : f32
    %68 = vector.broadcast %cst_26 : f32 to vector<1x16xf32>
    %69 = arith.addf %65, %68 : vector<1x16xf32>
    %70 = math.rsqrt %69 : vector<1x16xf32>
    %71 = vector.broadcast %70 : vector<1x16xf32> to vector<8x16xf32>
    %72 = arith.mulf %67, %71 : vector<8x16xf32>
    %c80 = arith.constant 80 : index
    %c0_27 = arith.constant 0 : index
    %73 = vector.load %arg3[%c80, %c0_27] : memref<96x16xf32, #tpu.memory_space<vmem>>, vector<1x16xf32>
    %74 = vector.broadcast %73 : vector<1x16xf32> to vector<8x16xf32>
    %75 = arith.mulf %74, %72 : vector<8x16xf32>
    %76 = arith.mulf %75, %72 : vector<8x16xf32>
    %c88 = arith.constant 88 : index
    %c0_28 = arith.constant 0 : index
    %77 = vector.load %arg3[%c88, %c0_28] : memref<96x16xf32, #tpu.memory_space<vmem>>, vector<1x16xf32>
    %78 = vector.broadcast %77 : vector<1x16xf32> to vector<8x16xf32>
    %79 = arith.mulf %78, %72 : vector<8x16xf32>
    %80 = arith.addf %76, %79 : vector<8x16xf32>
    %cst_29 = arith.constant dense<0.000000e+00> : vector<8xf32>
    %81 = vector.multi_reduction <add>, %80, %cst_29 [1] : vector<8x16xf32> to vector<8xf32>
    %82 = vector.shape_cast %81 : vector<8xf32> to vector<8x1xf32>
    %83 = arith.addf %44, %82 : vector<8x1xf32>
    %84 = vector.broadcast %3 : f32 to vector<8x1xf32>
    %85 = arith.addf %83, %84 : vector<8x1xf32>
    %c0_30 = arith.constant 0 : index
    %c0_31 = arith.constant 0 : index
    %86 = vector.load %arg4[%c0_30, %c0_31] : memref<8x1xf32, #tpu.memory_space<vmem>>, vector<8x1xf32>
    tpu.vector_store %arg4[%c0_30, %c0_31], %85 {strides = array<i32>} : memref<8x1xf32, #tpu.memory_space<vmem>>, vector<8x1xf32>,
    %c0_32 = arith.constant 0 : index
    %c0_33 = arith.constant 0 : index
    %87 = vector.load %arg5[%c0_32, %c0_33] : memref<8x32xf32, #tpu.memory_space<vmem>>, vector<8x16xf32>
    tpu.vector_store %arg5[%c0_32, %c0_33], %32 {strides = array<i32>} : memref<8x32xf32, #tpu.memory_space<vmem>>, vector<8x16xf32>,
    %c0_34 = arith.constant 0 : index
    %c16_35 = arith.constant 16 : index
    %88 = vector.load %arg5[%c0_34, %c16_35] : memref<8x32xf32, #tpu.memory_space<vmem>>, vector<8x16xf32>
    tpu.vector_store %arg5[%c0_34, %c16_35], %39 {strides = array<i32>} : memref<8x32xf32, #tpu.memory_space<vmem>>, vector<8x16xf32>,
    return
  }
}

</mosaic_0001>

<llo_original>
// kernel: tpu_custom_call.1
$region0: #{tpu_custom_call.1}
  #allocation0 [shape = 'u32[]', space=smem, size = 0x4, offset = 0x4, fixed_abs, tag = 'smem constant byte address 0x4 - core index']
  #allocation1 [shape = 'u32[144,128]{1,0:T(1,128)}', space=vmem, size = 0x12000, scoped, tag = 'internal scratch']
  %s0 = inlined_call_operand.vmem [shape: f32[4], index: 0, kind: input, shape index: {}]
  %s1 = inlined_call_operand.vmem [shape: f32[8,16], index: 1, kind: input, shape index: {}]
  %s2 = inlined_call_operand.vmem [shape: f32[48,64], index: 2, kind: input, shape index: {}]
  %s3 = inlined_call_operand.vmem [shape: f32[96,16], index: 3, kind: input, shape index: {}]
  %s4 = inlined_call_operand.vmem [shape: f32[8,1], index: 4, kind: output, shape index: {0}]
  %s5 = inlined_call_operand.hbm [shape: f32[8,32], index: 5, kind: output, shape index: {1}]
  %6 = xla_tuple %s4, %s5
  %s7 = sld [smem:[#allocation0]]
  $region38: #{tpu_custom_call.1} parent=0
    _
  %s9 = ssub.s32 1, %s7
  %s10 = scalar_select 0, %s9, %s7
  $region1: #{tpu_custom_call.1} parent=0
    #allocation2 [shape = 'u8[512]{0}', space=smem, size = 0x200, scoped, tag = 'input window, operand 0, single buffered']
    #allocation3 [shape = 's32[1]{0}', space=sflag, size = 0x4, scoped, tag = 'scoped memory for tpu_custom_call.1']
    #allocation4 [shape = 's32[1]{0}', space=sflag, size = 0x4, scoped, tag = 'scoped memory for tpu_custom_call.1']
    #allocation5 [shape = 'u8[4096]{0}', space=vmem, size = 0x1000, scoped, tag = 'output window, operand 1, single buffered']
    %11 = vsyncpa [#allocation4], 0
    %12 = vsyncpa [#allocation3], 0
    // Predicated region
    $region2: #{tpu_custom_call.1} parent=1 // pred_check
      _
    $region3: #{tpu_custom_call.1} parent=1 // pred_check_branch
      %14 = sbr.rel (0) target = $region5
    $region4: #{tpu_custom_call.1} parent=1 // pred_region
      %s16 = ssub.s32 16, 16
      %17 = vsyncadd [#allocation4], %s16
      %s19 = sshll.u32 %s0, 4
      %s20 = int_to_ptr.vmem [resolvable:$true] %s19
      %22 = dma.vmem_to_smem %s20, 16, [#allocation2], [#allocation4]
    $region5: #{tpu_custom_call.1} parent=1 // pred_fallthru
      _
    // Predicated region
    $region6: #{tpu_custom_call.1} parent=1 // pred_check
      _
    $region7: #{tpu_custom_call.1} parent=1 // pred_check_branch
      %24 = sbr.rel (0) target = $region9
    $region8: #{tpu_custom_call.1} parent=1 // pred_region
      _
    $region9: #{tpu_custom_call.1} parent=1 // pred_fallthru
      _
    // Predicated region
    $region10: #{tpu_custom_call.1} parent=1 // pred_check
      _
    $region11: #{tpu_custom_call.1} parent=1 // pred_check_branch
      %26 = sbr.rel (0) target = $region13
    $region12: #{tpu_custom_call.1} parent=1 // pred_region
      _
    $region13: #{tpu_custom_call.1} parent=1 // pred_fallthru
      _
    // Predicated region
    $region14: #{tpu_custom_call.1} parent=1 // pred_check
      _
    $region15: #{tpu_custom_call.1} parent=1 // pred_check_branch
      %28 = sbr.rel (0) target = $region17
    $region16: #{tpu_custom_call.1} parent=1 // pred_region
      _
    $region17: #{tpu_custom_call.1} parent=1 // pred_fallthru
      _
    // Predicated region
    $region18: #{tpu_custom_call.1} parent=1 // pred_check
      _
    $region19: #{tpu_custom_call.1} parent=1 // pred_check_branch
      %30 = sbr.rel (0) target = $region21
    $region20: #{tpu_custom_call.1} parent=1 // pred_region
      %31 = dma.done [#allocation4], 16
    $region21: #{tpu_custom_call.1} parent=1 // pred_fallthru
      _
    %32 = sfence
    %s33 = sld [smem:[#allocation2]]
    %s34 = sld [smem:[#allocation2 + $0x1]]
    %s35 = sld [smem:[#allocation2 + $0x2]]
    %s36 = sld [smem:[#allocation2 + $0x3]]
    %v37 = vld [vmem:[%s1] sm:$0xff]
    %v38 = vld [vmem:[%s2] sm:$0xff]
    %v39 = vld [vmem:[%s2 + $0x8] sm:$0xff]
    %v40 = vld [vmem:[%s2 + $0x20] sm:$0x1]
    %v41 = vlaneseq
    %v42 = vshrl.u32 %v41, 7
    %v43 = vsub.s32 0, %v42
    %v44 = vrot.slane %v40, %v43
    %vm45 = vcmask 130048
    %v47 = vsel %vm45, %v37, 0
    %49 = vmatprep.subr.mxu0 0.0
    %50 = vmatpush1.msra.mxu0 %v38
    %51 = vmatprep.subr.mxu0 0.0
    %52 = vmatpush1.msra.mxu0 %v39
    %53 = vmatprep.subr.mxu0 0.0
    %54 = vmatpush1.msra.mxu0 0.0
    %55 = vmatprep.subr.mxu0 0.0
    %56 = vmatpush1.msra.mxu0 0.0
    %57 = vmatprep.subr.mxu0 0.0
    %58 = vmatpush1.msra.mxu0 0.0
    %59 = vmatprep.subr.mxu0 0.0
    %60 = vmatpush1.msra.mxu0 0.0
    %61 = vmatprep.subr.mxu0 0.0
    %62 = vmatpush1.msra.mxu0 0.0
    %63 = vmatprep.subr.mxu0 0.0
    %64 = vmatpush1.msra.mxu0 0.0
    %65 = vmatprep.subr.mxu0 0.0
    %66 = vmatpush1.msra.mxu0 0.0
    %67 = vmatprep.subr.mxu0 0.0
    %68 = vmatpush1.msra.mxu0 0.0
    %69 = vmatprep.subr.mxu0 0.0
    %70 = vmatpush1.msra.mxu0 0.0
    %71 = vmatprep.subr.mxu0 0.0
    %72 = vmatpush1.msra.mxu0 0.0
    %73 = vmatprep.subr.mxu0 0.0
    %74 = vmatpush1.msra.mxu0 0.0
    %75 = vmatprep.subr.mxu0 0.0
    %76 = vmatpush1.msra.mxu0 0.0
    %77 = vmatprep.subr.mxu0 0.0
    %78 = vmatpush1.msra.mxu0 0.0
    %79 = vmatprep.subr.mxu0 0.0
    %80 = vmatpush1.msra.mxu0 0.0
    %81 = vmatprep.subr.mxu0 0.0
    %82 = vmatpush1.msra.mxu0 0.0
    %83 = vmatprep.subr.mxu0 0.0
    %84 = vmatpush1.msra.mxu0 0.0
    %85 = vmatprep.subr.mxu0 0.0
    %86 = vmatpush1.msra.mxu0 0.0
    %87 = vmatprep.subr.mxu0 0.0
    %88 = vmatpush1.msra.mxu0 0.0
    %89 = vmatprep.subr.mxu0 0.0
    %90 = vmatpush1.msra.mxu0 0.0
    %91 = vmatprep.subr.mxu0 0.0
    %92 = vmatpush1.msra.mxu0 0.0
    %93 = vmatprep.subr.mxu0 0.0
    %94 = vmatpush1.msra.mxu0 0.0
    %95 = vmatprep.subr.mxu0 0.0
    %96 = vmatpush1.msra.mxu0 0.0
    %97 = vmatprep.subr.mxu0 0.0
    %98 = vmatpush1.msra.mxu0 0.0
    %99 = vmatprep.subr.mxu0 0.0
    %100 = vmatpush1.msra.mxu0 0.0
    %101 = vmatprep.subr.mxu0 0.0
    %102 = vmatpush1.msra.mxu0 0.0
    %103 = vmatprep.subr.mxu0 0.0
    %104 = vmatpush1.msra.mxu0 0.0
    %105 = vmatprep.subr.mxu0 0.0
    %106 = vmatpush1.msra.mxu0 0.0
    %107 = vmatprep.subr.mxu0 0.0
    %108 = vmatpush1.msra.mxu0 0.0
    %109 = vmatprep.subr.mxu0 0.0
    %110 = vmatpush1.msra.mxu0 0.0
    %111 = vmatprep.subr.mxu0 0.0
    %112 = vmatpush1.msra.mxu0 0.0
    %113 = vmatprep.mubr.f32.mxu0 0.0
    %114 = vmatmul.mubr.f32.gmra.mrb[0].mxu0 %v47
    %v115 = vpop.f32.mrb[0].mxu0
    %v116 = vadd.f32 %v44, %v115
    %v117 = vpop.f32.mrb[0].mxu0
    %118 = vdwg.mxu0
    %120 = vrot.lane.b32.xlu0 %v116, 96
    %v121 = vpop.permute.xlu0 %120
    %v123 = vmax.f32 %v116, %v121
    %v124 = vld [vmem:[%s3] sm:$0xff]
    %v125 = vld [vmem:[%s3 + $0x8] sm:$0xff]
    %v126 = vld [vmem:[%s3 + $0x10] sm:$0xff]
    %v127 = vld [vmem:[%s3 + $0x18] sm:$0xff]
    %vm128 = vcmask 261120
    %v130 = vsel %vm128, %v123, 0
    %132 = vmatprep.subr.mxu0 0.0
    %133 = vmatpush1.msra.mxu0 %v124
    %134 = vmatprep.subr.mxu0 0.0
    %135 = vmatpush1.msra.mxu0 %v125
    %136 = vmatprep.subr.mxu0 0.0
    %137 = vmatpush1.msra.mxu0 %v126
    %138 = vmatprep.subr.mxu0 0.0
    %139 = vmatpush1.msra.mxu0 %v127
    %140 = vmatprep.subr.mxu0 0.0
    %141 = vmatpush1.msra.mxu0 0.0
    %142 = vmatprep.subr.mxu0 0.0
    %143 = vmatpush1.msra.mxu0 0.0
    %144 = vmatprep.subr.mxu0 0.0
    %145 = vmatpush1.msra.mxu0 0.0
    %146 = vmatprep.subr.mxu0 0.0
    %147 = vmatpush1.msra.mxu0 0.0
    %148 = vmatprep.subr.mxu0 0.0
    %149 = vmatpush1.msra.mxu0 0.0
    %150 = vmatprep.subr.mxu0 0.0
    %151 = vmatpush1.msra.mxu0 0.0
    %152 = vmatprep.subr.mxu0 0.0
    %153 = vmatpush1.msra.mxu0 0.0
    %154 = vmatprep.subr.mxu0 0.0
    %155 = vmatpush1.msra.mxu0 0.0
    %156 = vmatprep.subr.mxu0 0.0
    %157 = vmatpush1.msra.mxu0 0.0
    %158 = vmatprep.subr.mxu0 0.0
    %159 = vmatpush1.msra.mxu0 0.0
    %160 = vmatprep.subr.mxu0 0.0
    %161 = vmatpush1.msra.mxu0 0.0
    %162 = vmatprep.subr.mxu0 0.0
    %163 = vmatpush1.msra.mxu0 0.0
    %164 = vmatprep.subr.mxu0 0.0
    %165 = vmatpush1.msra.mxu0 0.0
    %166 = vmatprep.subr.mxu0 0.0
    %167 = vmatpush1.msra.mxu0 0.0
    %168 = vmatprep.subr.mxu0 0.0
    %169 = vmatpush1.msra.mxu0 0.0
    %170 = vmatprep.subr.mxu0 0.0
    %171 = vmatpush1.msra.mxu0 0.0
    %172 = vmatprep.subr.mxu0 0.0
    %173 = vmatpush1.msra.mxu0 0.0
    %174 = vmatprep.subr.mxu0 0.0
    %175 = vmatpush1.msra.mxu0 0.0
    %176 = vmatprep.subr.mxu0 0.0
    %177 = vmatpush1.msra.mxu0 0.0
    %178 = vmatprep.subr.mxu0 0.0
    %179 = vmatpush1.msra.mxu0 0.0
    %180 = vmatprep.subr.mxu0 0.0
    %181 = vmatpush1.msra.mxu0 0.0
    %182 = vmatprep.subr.mxu0 0.0
    %183 = vmatpush1.msra.mxu0 0.0
    %184 = vmatprep.subr.mxu0 0.0
    %185 = vmatpush1.msra.mxu0 0.0
    %186 = vmatprep.subr.mxu0 0.0
    %187 = vmatpush1.msra.mxu0 0.0
    %188 = vmatprep.subr.mxu0 0.0
    %189 = vmatpush1.msra.mxu0 0.0
    %190 = vmatprep.subr.mxu0 0.0
    %191 = vmatpush1.msra.mxu0 0.0
    %192 = vmatprep.subr.mxu0 0.0
    %193 = vmatpush1.msra.mxu0 0.0
    %194 = vmatprep.subr.mxu0 0.0
    %195 = vmatpush1.msra.mxu0 0.0
    %196 = vmatprep.mubr.f32.mxu0 0.0
    %197 = vmatmul.mubr.f32.gmra.mrb[0].mxu0 %v130
    %v198 = vpop.f32.mrb[0].mxu0
    %v199 = vadd.f32 0.0, %v198
    %v200 = vpop.f32.mrb[0].mxu0
    %201 = vdwg.mxu0
    %v202 = vsel %vm45, %v199, 0.0
    %v203 = vrot.slane %v202, 4
    %v204 = vadd.f32 %v202, %v203
    %v205 = vrot.slane %v204, 2
    %v206 = vadd.f32 %v204, %v205
    %v207 = vrot.slane %v206, 1
    %v208 = vadd.f32 %v206, %v207
    %v209 = vrcp.pop 8.0
    %v210 = vmul.f32 %v208, %v209
    %v211 = vsub.f32 %v199, %v210
    %v212 = vmul.f32 %v211, %v211
    %v213 = vsel %vm45, %v212, 0.0
    %v214 = vrot.slane %v213, 4
    %v215 = vadd.f32 %v213, %v214
    %v216 = vrot.slane %v215, 2
    %v217 = vadd.f32 %v215, %v216
    %v218 = vrot.slane %v217, 1
    %v219 = vadd.f32 %v217, %v218
    %v220 = vmul.f32 %v219, %v209
    %v221 = vadd.f32 %v220, 1e-05
    %v222 = vrsqrt.pop %v221
    %v223 = vmul.f32 %v211, %v222
    %v224 = vstv %s35
    %v225 = vsub.f32 %v223, %v224
    %v226 = vstv %s33
    %v227 = vmul.f32 %v226, %v225
    %v228 = vstv %s34
    %v229 = vmul.f32 %v228, %v225
    %v230 = vmax.f32 %v227, %v229
    %v231 = vld [vmem:[%s3 + $0x40] sm:$0xff]
    %v232 = vld [vmem:[%s3 + $0x48] sm:$0xff]
    %v234 = vsel %vm45, %v230, 0
    %236 = vmatprep.subr.mxu0 0.0
    %237 = vmatpush1.msra.mxu0 %v231
    %238 = vmatprep.subr.mxu0 0.0
    %239 = vmatpush1.msra.mxu0 %v232
    %240 = vmatprep.subr.mxu0 0.0
    %241 = vmatpush1.msra.mxu0 0.0
    %242 = vmatprep.subr.mxu0 0.0
    %243 = vmatpush1.msra.mxu0 0.0
    %244 = vmatprep.subr.mxu0 0.0
    %245 = vmatpush1.msra.mxu0 0.0
    %246 = vmatprep.subr.mxu0 0.0
    %247 = vmatpush1.msra.mxu0 0.0
    %248 = vmatprep.subr.mxu0 0.0
    %249 = vmatpush1.msra.mxu0 0.0
    %250 = vmatprep.subr.mxu0 0.0
    %251 = vmatpush1.msra.mxu0 0.0
    %252 = vmatprep.subr.mxu0 0.0
    %253 = vmatpush1.msra.mxu0 0.0
    %254 = vmatprep.subr.mxu0 0.0
    %255 = vmatpush1.msra.mxu0 0.0
    %256 = vmatprep.subr.mxu0 0.0
    %257 = vmatpush1.msra.mxu0 0.0
    %258 = vmatprep.subr.mxu0 0.0
    %259 = vmatpush1.msra.mxu0 0.0
    %260 = vmatprep.subr.mxu0 0.0
    %261 = vmatpush1.msra.mxu0 0.0
    %262 = vmatprep.subr.mxu0 0.0
    %263 = vmatpush1.msra.mxu0 0.0
    %264 = vmatprep.subr.mxu0 0.0
    %265 = vmatpush1.msra.mxu0 0.0
    %266 = vmatprep.subr.mxu0 0.0
    %267 = vmatpush1.msra.mxu0 0.0
    %268 = vmatprep.subr.mxu0 0.0
    %269 = vmatpush1.msra.mxu0 0.0
    %270 = vmatprep.subr.mxu0 0.0
    %271 = vmatpush1.msra.mxu0 0.0
    %272 = vmatprep.subr.mxu0 0.0
    %273 = vmatpush1.msra.mxu0 0.0
    %274 = vmatprep.subr.mxu0 0.0
    %275 = vmatpush1.msra.mxu0 0.0
    %276 = vmatprep.subr.mxu0 0.0
    %277 = vmatpush1.msra.mxu0 0.0
    %278 = vmatprep.subr.mxu0 0.0
    %279 = vmatpush1.msra.mxu0 0.0
    %280 = vmatprep.subr.mxu0 0.0
    %281 = vmatpush1.msra.mxu0 0.0
    %282 = vmatprep.subr.mxu0 0.0
    %283 = vmatpush1.msra.mxu0 0.0
    %284 = vmatprep.subr.mxu0 0.0
    %285 = vmatpush1.msra.mxu0 0.0
    %286 = vmatprep.subr.mxu0 0.0
    %287 = vmatpush1.msra.mxu0 0.0
    %288 = vmatprep.subr.mxu0 0.0
    %289 = vmatpush1.msra.mxu0 0.0
    %290 = vmatprep.subr.mxu0 0.0
    %291 = vmatpush1.msra.mxu0 0.0
    %292 = vmatprep.subr.mxu0 0.0
    %293 = vmatpush1.msra.mxu0 0.0
    %294 = vmatprep.subr.mxu0 0.0
    %295 = vmatpush1.msra.mxu0 0.0
    %296 = vmatprep.subr.mxu0 0.0
    %297 = vmatpush1.msra.mxu0 0.0
    %298 = vmatprep.subr.mxu0 0.0
    %299 = vmatpush1.msra.mxu0 0.0
    %300 = vmatprep.mubr.f32.mxu0 0.0
    %301 = vmatmul.mubr.f32.gmra.mrb[0].mxu0 %v234
    %v302 = vpop.f32.mrb[0].mxu0
    %v303 = vadd.f32 0.0, %v302
    %v304 = vpop.f32.mrb[0].mxu0
    %305 = vdwg.mxu0
    %v306 = vmul.f32 %v303, %v223
    %v307 = vsel %vm45, %v306, 0.0
    %308 = vadd.xlane.f32.xlu0 %v307
    %v309 = vpop.xlane.xlu0 %308
    %v310 = vld [vmem:[%s2 + $0x10] sm:$0xff]
    %v311 = vld [vmem:[%s2 + $0x18] sm:$0xff]
    %v312 = vld [vmem:[%s2 + $0x28] sm:$0x1]
    %v313 = vlaneseq
    %v314 = vshrl.u32 %v313, 7
    %v315 = vsub.s32 0, %v314
    %v316 = vrot.slane %v312, %v315
    %v318 = vsel %vm45, %v223, 0
    %320 = vmatprep.subr.mxu0 0.0
    %321 = vmatpush1.msra.mxu0 %v310
    %322 = vmatprep.subr.mxu0 0.0
    %323 = vmatpush1.msra.mxu0 %v311
    %324 = vmatprep.subr.mxu0 0.0
    %325 = vmatpush1.msra.mxu0 0.0
    %326 = vmatprep.subr.mxu0 0.0
    %327 = vmatpush1.msra.mxu0 0.0
    %328 = vmatprep.subr.mxu0 0.0
    %329 = vmatpush1.msra.mxu0 0.0
    %330 = vmatprep.subr.mxu0 0.0
    %331 = vmatpush1.msra.mxu0 0.0
    %332 = vmatprep.subr.mxu0 0.0
    %333 = vmatpush1.msra.mxu0 0.0
    %334 = vmatprep.subr.mxu0 0.0
    %335 = vmatpush1.msra.mxu0 0.0
    %336 = vmatprep.subr.mxu0 0.0
    %337 = vmatpush1.msra.mxu0 0.0
    %338 = vmatprep.subr.mxu0 0.0
    %339 = vmatpush1.msra.mxu0 0.0
    %340 = vmatprep.subr.mxu0 0.0
    %341 = vmatpush1.msra.mxu0 0.0
    %342 = vmatprep.subr.mxu0 0.0
    %343 = vmatpush1.msra.mxu0 0.0
    %344 = vmatprep.subr.mxu0 0.0
    %345 = vmatpush1.msra.mxu0 0.0
    %346 = vmatprep.subr.mxu0 0.0
    %347 = vmatpush1.msra.mxu0 0.0
    %348 = vmatprep.subr.mxu0 0.0
    %349 = vmatpush1.msra.mxu0 0.0
    %350 = vmatprep.subr.mxu0 0.0
    %351 = vmatpush1.msra.mxu0 0.0
    %352 = vmatprep.subr.mxu0 0.0
    %353 = vmatpush1.msra.mxu0 0.0
    %354 = vmatprep.subr.mxu0 0.0
    %355 = vmatpush1.msra.mxu0 0.0
    %356 = vmatprep.subr.mxu0 0.0
    %357 = vmatpush1.msra.mxu0 0.0
    %358 = vmatprep.subr.mxu0 0.0
    %359 = vmatpush1.msra.mxu0 0.0
    %360 = vmatprep.subr.mxu0 0.0
    %361 = vmatpush1.msra.mxu0 0.0
    %362 = vmatprep.subr.mxu0 0.0
    %363 = vmatpush1.msra.mxu0 0.0
    %364 = vmatprep.subr.mxu0 0.0
    %365 = vmatpush1.msra.mxu0 0.0
    %366 = vmatprep.subr.mxu0 0.0
    %367 = vmatpush1.msra.mxu0 0.0
    %368 = vmatprep.subr.mxu0 0.0
    %369 = vmatpush1.msra.mxu0 0.0
    %370 = vmatprep.subr.mxu0 0.0
    %371 = vmatpush1.msra.mxu0 0.0
    %372 = vmatprep.subr.mxu0 0.0
    %373 = vmatpush1.msra.mxu0 0.0
    %374 = vmatprep.subr.mxu0 0.0
    %375 = vmatpush1.msra.mxu0 0.0
    %376 = vmatprep.subr.mxu0 0.0
    %377 = vmatpush1.msra.mxu0 0.0
    %378 = vmatprep.subr.mxu0 0.0
    %379 = vmatpush1.msra.mxu0 0.0
    %380 = vmatprep.subr.mxu0 0.0
    %381 = vmatpush1.msra.mxu0 0.0
    %382 = vmatprep.subr.mxu0 0.0
    %383 = vmatpush1.msra.mxu0 0.0
    %384 = vmatprep.mubr.f32.mxu0 0.0
    %385 = vmatmul.mubr.f32.gmra.mrb[0].mxu0 %v318
    %v386 = vpop.f32.mrb[0].mxu0
    %v387 = vadd.f32 %v316, %v386
    %v388 = vpop.f32.mrb[0].mxu0
    %389 = vdwg.mxu0
    %391 = vrot.lane.b32.xlu0 %v387, 96
    %v392 = vpop.permute.xlu0 %391
    %v394 = vmax.f32 %v387, %v392
    %v395 = vld [vmem:[%s3 + $0x20] sm:$0xff]
    %v396 = vld [vmem:[%s3 + $0x28] sm:$0xff]
    %v397 = vld [vmem:[%s3 + $0x30] sm:$0xff]
    %v398 = vld [vmem:[%s3 + $0x38] sm:$0xff]
    %v400 = vsel %vm128, %v394, 0
    %402 = vmatprep.subr.mxu0 0.0
    %403 = vmatpush1.msra.mxu0 %v395
    %404 = vmatprep.subr.mxu0 0.0
    %405 = vmatpush1.msra.mxu0 %v396
    %406 = vmatprep.subr.mxu0 0.0
    %407 = vmatpush1.msra.mxu0 %v397
    %408 = vmatprep.subr.mxu0 0.0
    %409 = vmatpush1.msra.mxu0 %v398
    %410 = vmatprep.subr.mxu0 0.0
    %411 = vmatpush1.msra.mxu0 0.0
    %412 = vmatprep.subr.mxu0 0.0
    %413 = vmatpush1.msra.mxu0 0.0
    %414 = vmatprep.subr.mxu0 0.0
    %415 = vmatpush1.msra.mxu0 0.0
    %416 = vmatprep.subr.mxu0 0.0
    %417 = vmatpush1.msra.mxu0 0.0
    %418 = vmatprep.subr.mxu0 0.0
    %419 = vmatpush1.msra.mxu0 0.0
    %420 = vmatprep.subr.mxu0 0.0
    %421 = vmatpush1.msra.mxu0 0.0
    %422 = vmatprep.subr.mxu0 0.0
    %423 = vmatpush1.msra.mxu0 0.0
    %424 = vmatprep.subr.mxu0 0.0
    %425 = vmatpush1.msra.mxu0 0.0
    %426 = vmatprep.subr.mxu0 0.0
    %427 = vmatpush1.msra.mxu0 0.0
    %428 = vmatprep.subr.mxu0 0.0
    %429 = vmatpush1.msra.mxu0 0.0
    %430 = vmatprep.subr.mxu0 0.0
    %431 = vmatpush1.msra.mxu0 0.0
    %432 = vmatprep.subr.mxu0 0.0
    %433 = vmatpush1.msra.mxu0 0.0
    %434 = vmatprep.subr.mxu0 0.0
    %435 = vmatpush1.msra.mxu0 0.0
    %436 = vmatprep.subr.mxu0 0.0
    %437 = vmatpush1.msra.mxu0 0.0
    %438 = vmatprep.subr.mxu0 0.0
    %439 = vmatpush1.msra.mxu0 0.0
    %440 = vmatprep.subr.mxu0 0.0
    %441 = vmatpush1.msra.mxu0 0.0
    %442 = vmatprep.subr.mxu0 0.0
    %443 = vmatpush1.msra.mxu0 0.0
    %444 = vmatprep.subr.mxu0 0.0
    %445 = vmatpush1.msra.mxu0 0.0
    %446 = vmatprep.subr.mxu0 0.0
    %447 = vmatpush1.msra.mxu0 0.0
    %448 = vmatprep.subr.mxu0 0.0
    %449 = vmatpush1.msra.mxu0 0.0
    %450 = vmatprep.subr.mxu0 0.0
    %451 = vmatpush1.msra.mxu0 0.0
    %452 = vmatprep.subr.mxu0 0.0
    %453 = vmatpush1.msra.mxu0 0.0
    %454 = vmatprep.subr.mxu0 0.0
    %455 = vmatpush1.msra.mxu0 0.0
    %456 = vmatprep.subr.mxu0 0.0
    %457 = vmatpush1.msra.mxu0 0.0
    %458 = vmatprep.subr.mxu0 0.0
    %459 = vmatpush1.msra.mxu0 0.0
    %460 = vmatprep.subr.mxu0 0.0
    %461 = vmatpush1.msra.mxu0 0.0
    %462 = vmatprep.subr.mxu0 0.0
    %463 = vmatpush1.msra.mxu0 0.0
    %464 = vmatprep.subr.mxu0 0.0
    %465 = vmatpush1.msra.mxu0 0.0
    %466 = vmatprep.mubr.f32.mxu0 0.0
    %467 = vmatmul.mubr.f32.gmra.mrb[0].mxu0 %v400
    %v468 = vpop.f32.mrb[0].mxu0
    %v469 = vadd.f32 0.0, %v468
    %v470 = vpop.f32.mrb[0].mxu0
    %471 = vdwg.mxu0
    %v472 = vsel %vm45, %v469, 0.0
    %v473 = vrot.slane %v472, 4
    %v474 = vadd.f32 %v472, %v473
    %v475 = vrot.slane %v474, 2
    %v476 = vadd.f32 %v474, %v475
    %v477 = vrot.slane %v476, 1
    %v478 = vadd.f32 %v476, %v477
    %v479 = vmul.f32 %v478, %v209
    %v480 = vsub.f32 %v469, %v479
    %v481 = vmul.f32 %v480, %v480
    %v482 = vsel %vm45, %v481, 0.0
    %v483 = vrot.slane %v482, 4
    %v484 = vadd.f32 %v482, %v483
    %v485 = vrot.slane %v484, 2
    %v486 = vadd.f32 %v484, %v485
    %v487 = vrot.slane %v486, 1
    %v488 = vadd.f32 %v486, %v487
    %v489 = vmul.f32 %v488, %v209
    %v490 = vadd.f32 %v489, 1e-05
    %v491 = vrsqrt.pop %v490
    %v492 = vmul.f32 %v480, %v491
    %v493 = vld [vmem:[%s3 + $0x50] sm:$0x1]
    %v494 = vlaneseq
    %v495 = vshrl.u32 %v494, 7
    %v496 = vsub.s32 0, %v495
    %v497 = vrot.slane %v493, %v496
    %v498 = vmul.f32 %v497, %v492
    %v499 = vmul.f32 %v498, %v492
    %v500 = vld [vmem:[%s3 + $0x58] sm:$0x1]
    %v501 = vlaneseq
    %v502 = vshrl.u32 %v501, 7
    %v503 = vsub.s32 0, %v502
    %v504 = vrot.slane %v500, %v503
    %v505 = vmul.f32 %v504, %v492
    %v506 = vadd.f32 %v499, %v505
    %v507 = vsel %vm45, %v506, 0.0
    %508 = vadd.xlane.f32.xlu0 %v507
    %v509 = vpop.xlane.xlu0 %508
    %v510 = vadd.f32 %v309, %v509
    %v511 = vstv %s36
    %v512 = vadd.f32 %v510, %v511
    %vm513 = vcmask 7168
    %514 = vst.msk [vmem:[%s4] sm:$0xff] %vm513, %v512
    %515 = vst.msk [vmem:[#allocation5] sm:$0xff] %vm45, %v223
    %516 = vrot.lane.b32.xlu0 %v230, 16
    %v517 = vpop.permute.xlu0 %516
    %vm519 = vcmask 261248
    %520 = vst.msk [vmem:[#allocation5] sm:$0xff] %vm519, %v517
    // Predicated region
    $region22: #{tpu_custom_call.1} parent=1 // pred_check
      _
    $region23: #{tpu_custom_call.1} parent=1 // pred_check_branch
      %522 = sbr.rel (0) target = $region25
    $region24: #{tpu_custom_call.1} parent=1 // pred_region
      _
    $region25: #{tpu_custom_call.1} parent=1 // pred_fallthru
      _
    // Predicated region
    $region26: #{tpu_custom_call.1} parent=1 // pred_check
      _
    $region27: #{tpu_custom_call.1} parent=1 // pred_check_branch
      %524 = sbr.rel (0) target = $region29
    $region28: #{tpu_custom_call.1} parent=1 // pred_region
      %s526 = ssub.s32 128, 128
      %527 = vsyncadd [#allocation3], %s526
      %s529 = sshll.u32 [#allocation5], 4
      %s530 = int_to_ptr.vmem [resolvable:$true] %s529
      %532 = dma.vmem_to_hbm [thread:$0]  %s530, 128, %s5, [#allocation3]
    $region29: #{tpu_custom_call.1} parent=1 // pred_fallthru
      _
    // Predicated region
    $region30: #{tpu_custom_call.1} parent=1 // pred_check
      _
    $region31: #{tpu_custom_call.1} parent=1 // pred_check_branch
      %534 = sbr.rel (0) target = $region33
    $region32: #{tpu_custom_call.1} parent=1 // pred_region
      _
    $region33: #{tpu_custom_call.1} parent=1 // pred_fallthru
      _
    // Predicated region
    $region34: #{tpu_custom_call.1} parent=1 // pred_check
      _
    $region35: #{tpu_custom_call.1} parent=1 // pred_check_branch
      %536 = sbr.rel (0) target = $region37
    $region36: #{tpu_custom_call.1} parent=1 // pred_region
      %537 = dma.done [#allocation3], 128
    $region37: #{tpu_custom_call.1} parent=1 // pred_fallthru
      _
    %538 = vsyncpa [#allocation3], 1
    %539 = vsyncpa [#allocation4], 1

</llo_original>
